<compile_context>
chip_gen: v5e
topology: v5e:2x2
jax: 0.10.0
libtpu: 0.0.40
codegen_flags: <defaults>
</compile_context>

<pallas_src>
import jax
import jax.numpy as jnp
from jax.experimental import pallas as pl
from jax.experimental.pallas import tpu as pltpu


def _apply_chain_kernel(x_ref, scale_ref, bias_ref, o_ref):
    """Fused transform chain: per-channel affine jitter followed by tanh saturation."""
    y = x_ref[...] * scale_ref[...] + bias_ref[...]
    o_ref[...] = jnp.tanh(y)


def _pick_tile_rows(n_rows, n_lanes, itemsize, target_bytes=4 << 20):
    """~4 MiB f32 tiles: 2 inputs' worth of double-buffering + out stays well under
    the 32 MiB scoped-VMEM default (v7x has only 64 MiB physical VMEM)."""
    rows = max(1, target_bytes // max(1, n_lanes * itemsize))
    if rows >= n_rows:
        return n_rows                      # single block == full dim (always legal)
    rows = max(8, (rows // 8) * 8)         # keep the sublane dim divisible by 8
    return min(rows, n_rows)


def _pallas_apply(x2, scale, bias):
    """Run the fused transform chain on the flattened (rows, lanes) slab."""
    R, L = x2.shape
    tr = _pick_tile_rows(R, L, x2.dtype.itemsize)
    grid = (pl.cdiv(R, tr),)
    return pl.pallas_call(
        _apply_chain_kernel,
        out_shape=jax.ShapeDtypeStruct(x2.shape, x2.dtype),
        grid_spec=pl.GridSpec(
            grid=grid,
            in_specs=[
                pl.BlockSpec((tr, L), lambda i: (i, 0)),   # x tile (lane-dense)
                pl.BlockSpec((tr, 1), lambda i: (i, 0)),   # per-row scale
                pl.BlockSpec((tr, 1), lambda i: (i, 0)),   # per-row bias
            ],
            out_specs=pl.BlockSpec((tr, L), lambda i: (i, 0)),
        ),
        compiler_params=pltpu.CompilerParams(
            # Row-tile axis is independent work -> shard across v7x's 2 TensorCores.
            dimension_semantics=("parallel",),
        ),
    )(x2, scale, bias)


def random_apply(x, scale_c, bias_c, key, p=0.5):
    """RandomApply.__all: with prob p apply [affine jitter, tanh] to x, else passthrough.

    x: float32 [N, C, H, W] (NCHW, like the PyTorch module)
    scale_c, bias_c: float32 [C] per-channel transform parameters
    """
    N, C, H, W = x.shape
    x2 = x.reshape(N * C, H * W)

    # Expand per-channel params to one value per (n, c) row of the flattened slab.
    scale = jnp.tile(scale_c, (N,)).reshape(N * C, 1).astype(x.dtype)
    bias = jnp.tile(bias_c, (N,)).reshape(N * C, 1).astype(x.dtype)

    # torch:  if self.p < torch.rand(1): return x   (i.e. apply iff u <= p)
    u = jax.random.uniform(key, ())

    # Skip path is a pure no-op: no pallas_call, no HBM read/write of x.
    out2 = jax.lax.cond(
        u <= p,
        lambda: _pallas_apply(x2, scale, bias),
        lambda: x2,
    )
    return out2.reshape(N, C, H, W)


if __name__ == "__main__":
    key = jax.random.PRNGKey(0)
    k_x, k_apply = jax.random.split(key)

    N, C, H, W = 2, 4, 16, 16
    x = jax.random.normal(k_x, (N, C, H, W), dtype=jnp.float32)

    # Deterministic per-channel transform parameters (synthetic, not a checkpoint).
    scale_c = 1.0 + 0.1 * jnp.arange(C, dtype=jnp.float32)   # [1.0, 1.1, 1.2, 1.3]
    bias_c = 0.05 * jnp.arange(C, dtype=jnp.float32)         # [0.0, 0.05, 0.1, 0.15]

    # 1) Force the Pallas kernel to run (apply path), independent of the random draw.
    x2 = x.reshape(N * C, H * W)
    scale = jnp.tile(scale_c, (N,)).reshape(N * C, 1)
    bias = jnp.tile(bias_c, (N,)).reshape(N * C, 1)
    applied_kernel = jax.block_until_ready(_pallas_apply(x2, scale, bias))
    applied_ref = jnp.tanh(
        x * scale_c[None, :, None, None] + bias_c[None, :, None, None]
    ).reshape(N * C, H * W)
    assert jnp.allclose(applied_kernel, applied_ref, atol=1e-6), "apply-path mismatch"

    # 2) Full RandomApply.__all semantics (apply-or-skip via host-side lax.cond).
    p = 0.5
    out = jax.block_until_ready(random_apply(x, scale_c, bias_c, k_apply, p=p))

    u = jax.random.uniform(k_apply, ())
    ref = jnp.where(u <= p, applied_ref.reshape(N, C, H, W), x)
    assert out.shape == (N, C, H, W)
    assert jnp.allclose(out, ref, atol=1e-6), "mismatch vs reference"

    print("KERNEL_OK")
</pallas_src>

<mosaic_0001>
module attributes {stable_mosaic.version = 11 : i64} {
  func.func @_apply_chain_kernel(%arg0: i32, %arg1: memref<8x256xf32, #tpu.memory_space<vmem>>, %arg2: memref<8x1xf32, #tpu.memory_space<vmem>>, %arg3: memref<8x1xf32, #tpu.memory_space<vmem>>, %arg4: memref<8x256xf32, #tpu.memory_space<vmem>>) attributes {dimension_semantics = [#tpu.dimension_semantics<parallel>], iteration_bounds = array<i64: 1>, scalar_prefetch = 0 : i64, scratch_operands = 0 : i64, tpu.core_type = #tpu.core_type<tc>, window_params = [{transform_indices = @transform_0, window_bounds = array<i64: 8, 256>}, {transform_indices = @transform_1, window_bounds = array<i64: 8, 1>}, {transform_indices = @transform_2, window_bounds = array<i64: 8, 1>}, {transform_indices = @transform_3, window_bounds = array<i64: 8, 256>}]} {
    %c0 = arith.constant 0 : index
    %c0_0 = arith.constant 0 : index
    %0 = vector.load %arg1[%c0, %c0_0] : memref<8x256xf32, #tpu.memory_space<vmem>>, vector<8x256xf32>
    %c0_1 = arith.constant 0 : index
    %c0_2 = arith.constant 0 : index
    %1 = vector.load %arg2[%c0_1, %c0_2] : memref<8x1xf32, #tpu.memory_space<vmem>>, vector<8x1xf32>
    %2 = vector.broadcast %1 : vector<8x1xf32> to vector<8x256xf32>
    %3 = arith.mulf %0, %2 : vector<8x256xf32>
    %c0_3 = arith.constant 0 : index
    %c0_4 = arith.constant 0 : index
    %4 = vector.load %arg3[%c0_3, %c0_4] : memref<8x1xf32, #tpu.memory_space<vmem>>, vector<8x1xf32>
    %5 = vector.broadcast %4 : vector<8x1xf32> to vector<8x256xf32>
    %6 = arith.addf %3, %5 : vector<8x256xf32>
    %7 = math.tanh %6 : vector<8x256xf32>
    %c0_5 = arith.constant 0 : index
    %c0_6 = arith.constant 0 : index
    %8 = vector.load %arg4[%c0_5, %c0_6] : memref<8x256xf32, #tpu.memory_space<vmem>>, vector<8x256xf32>
    tpu.vector_store %arg4[%c0_5, %c0_6], %7 {strides = array<i32>} : memref<8x256xf32, #tpu.memory_space<vmem>>, vector<8x256xf32>,
    return
  }
  func.func @transform_0(%arg0: i32) -> (i32, i32) {
    %c0_i32 = arith.constant 0 : i32
    %c0_i32_0 = arith.constant 0 : i32
    return %arg0, %c0_i32 : i32, i32
  }
  func.func @transform_1(%arg0: i32) -> (i32, i32) {
    %c0_i32 = arith.constant 0 : i32
    %c0_i32_0 = arith.constant 0 : i32
    return %arg0, %c0_i32 : i32, i32
  }
  func.func @transform_2(%arg0: i32) -> (i32, i32) {
    %c0_i32 = arith.constant 0 : i32
    %c0_i32_0 = arith.constant 0 : i32
    return %arg0, %c0_i32 : i32, i32
  }
  func.func @transform_3(%arg0: i32) -> (i32, i32) {
    %c0_i32 = arith.constant 0 : i32
    %c0_i32_0 = arith.constant 0 : i32
    return %arg0, %c0_i32 : i32, i32
  }
}

</mosaic_0001>

<llo_original>
// kernel: tpu_custom_call.1
$region0: #{tpu_custom_call.1}
  #allocation0 [shape = 'u32[]', space=smem, size = 0x4, offset = 0x4, fixed_abs, tag = 'smem constant byte address 0x4 - core index']
  #allocation1 [shape = 'u32[72,128]{1,0:T(1,128)}', space=vmem, size = 0x9000, scoped, tag = 'internal scratch']
  %s0 = inlined_call_operand.vmem [shape: f32[8,256], index: 0, kind: input, shape index: {}]
  %s1 = inlined_call_operand.vmem [shape: f32[8,1], index: 1, kind: input, shape index: {}]
  %s2 = inlined_call_operand.vmem [shape: f32[8,1], index: 2, kind: input, shape index: {}]
  %s3 = inlined_call_operand.hbm [shape: f32[8,256], index: 3, kind: output, shape index: {}]
  %s4 = sld [smem:[#allocation0]]
  $region22: #{tpu_custom_call.1} parent=0
    _
  %s6 = ssub.s32 1, %s4
  %s7 = scalar_select 0, %s6, %s4
  $region1: #{tpu_custom_call.1} parent=0
    #allocation2 [shape = 'u8[8192]{0}', space=vmem, size = 0x2000, scoped, tag = 'output window, operand 0, single buffered']
    #allocation3 [shape = 's32[1]{0}', space=sflag, size = 0x4, scoped, tag = 'scoped memory for tpu_custom_call.1']
    %8 = vsyncpa [#allocation3], 0
    // Predicated region
    $region2: #{tpu_custom_call.1} parent=1 // pred_check
      _
    $region3: #{tpu_custom_call.1} parent=1 // pred_check_branch
      %10 = sbr.rel (0) target = $region5
    $region4: #{tpu_custom_call.1} parent=1 // pred_region
      _
    $region5: #{tpu_custom_call.1} parent=1 // pred_fallthru
      _
    // Predicated region
    $region6: #{tpu_custom_call.1} parent=1 // pred_check
      _
    $region7: #{tpu_custom_call.1} parent=1 // pred_check_branch
      %12 = sbr.rel (0) target = $region9
    $region8: #{tpu_custom_call.1} parent=1 // pred_region
      _
    $region9: #{tpu_custom_call.1} parent=1 // pred_fallthru
      _
    // Predicated region
    $region10: #{tpu_custom_call.1} parent=1 // pred_check
      _
    $region11: #{tpu_custom_call.1} parent=1 // pred_check_branch
      %14 = sbr.rel (0) target = $region13
    $region12: #{tpu_custom_call.1} parent=1 // pred_region
      _
    $region13: #{tpu_custom_call.1} parent=1 // pred_fallthru
      _
    %v15 = vld [vmem:[%s0] sm:$0xff]
    %v16 = vld [vmem:[%s0 + $0x8] sm:$0xff]
    %v17 = vld [vmem:[%s1] sm:$0xff]
    %19 = vset.pattern.permute.xlu0 0
    %20 = vperm.xlu0 %19, %v17
    %v21 = vpop.permute.xlu0 %20
    %v23 = vmul.f32 %v15, %v21
    %v24 = vmul.f32 %v16, %v21
    %v25 = vld [vmem:[%s2] sm:$0xff]
    %27 = vset.pattern.permute.xlu0 0
    %28 = vperm.xlu0 %27, %v25
    %v29 = vpop.permute.xlu0 %28
    %v31 = vadd.f32 %v23, %v29
    %v32 = vadd.f32 %v24, %v29
    %v33 = vtanh.pop %v31
    %v34 = vtanh.pop %v32
    %35 = vst [vmem:[#allocation2] sm:$0xff] %v33
    %36 = vst [vmem:[#allocation2 + $0x8] sm:$0xff] %v34
    // Predicated region
    $region14: #{tpu_custom_call.1} parent=1 // pred_check
      _
    $region15: #{tpu_custom_call.1} parent=1 // pred_check_branch
      %38 = sbr.rel (0) target = $region17
    $region16: #{tpu_custom_call.1} parent=1 // pred_region
      %40 = vsyncadd [#allocation3], 0
      %s42 = sshll.u32 [#allocation2], 4
      %s43 = int_to_ptr.vmem [resolvable:$true] %s42
      %s44 = sshll.u32 %s3, 4
      %s45 = int_to_ptr.hbm [resolvable:$true] %s44
      %47 = dma.vmem_to_hbm [thread:$0]  %s43, 256, %s45, [#allocation3]
    $region17: #{tpu_custom_call.1} parent=1 // pred_fallthru
      _
    // Predicated region
    $region18: #{tpu_custom_call.1} parent=1 // pred_check
      _
    $region19: #{tpu_custom_call.1} parent=1 // pred_check_branch
      %49 = sbr.rel (0) target = $region21
    $region20: #{tpu_custom_call.1} parent=1 // pred_region
      %51 = dma.done [#allocation3], 256
    $region21: #{tpu_custom_call.1} parent=1 // pred_fallthru
      _
    %52 = vsyncpa [#allocation3], 1

</llo_original>
